<compile_context>
chip_gen: v7x
topology: tpu7x:2x2x1
jax: 0.10.0
libtpu: 0.0.40
codegen_flags: <defaults>
</compile_context>

<pallas_src>
import functools

import jax
import jax.numpy as jnp
from jax.experimental import pallas as pl
from jax.experimental.pallas import tpu as pltpu

LANE = 128  # TPU lane width (last-dim vreg extent)


def _round_up(x, m):
    return ((x + m - 1) // m) * m


def _pad2(a, rows, cols):
    r, c = a.shape
    if r == rows and c == cols:
        return a
    return jnp.pad(a, ((0, rows - r), (0, cols - c)))


def _chip_vmem_bytes():
    """Physical per-core VMEM; conservative 64 MiB fallback (v7x) if query fails."""
    try:
        return int(pltpu.get_tpu_info().vmem_capacity_bytes)
    except Exception:  # pragma: no cover - e.g. interpret mode / old runtime
        return 64 << 20


def _resident_spec(shape, index_map):
    """BlockSpec for a block whose index_map is constant across the grid.

    Single-buffered (pl.Buffered(1)) when supported: the block is fetched once and
    never changes, so a second pipeline buffer is pure VMEM waste.
    """
    buffered = getattr(pl, "Buffered", None)
    if buffered is not None:
        try:
            return pl.BlockSpec(shape, index_map, pipeline_mode=buffered(1))
        except TypeError:
            pass
    return pl.BlockSpec(shape, index_map)


def projection_kernel(x_ref, w1_ref, gamma_ref, beta_ref, w2_ref, o_ref, *,
                      eps, n_hidden, sub_m):
    """Fused lin1 -> LayerNorm -> ReLU -> lin2 on one [tile_m, n_in_p] batch tile."""
    tile_m = x_ref.shape[0]
    n_sub = tile_m // sub_m
    inv_n = jnp.float32(1.0 / n_hidden)

    # Statically-unrolled sub-tiles: the LLO scheduler can overlap the VPU/XLU/EUP
    # LayerNorm of sub-tile j with the MXU matmuls of sub-tile j+1.
    for j in range(n_sub):
        rows = pl.ds(j * sub_m, sub_m)

        # lin1: [sub_m, n_in_p] (bf16) @ [n_in_p, n_hidden_p] (bf16) -> f32.
        # Padded columns of W1^T are zero, so padded hidden columns of h are exactly 0.
        h = jnp.dot(x_ref[rows, :], w1_ref[...], preferred_element_type=jnp.float32)

        # One-pass LayerNorm statistics over the *real* hidden width. Padded lanes of h
        # are exactly zero, so the unmasked sums are already correct (no iota/mask pass).
        sum_h = jnp.sum(h, axis=-1, keepdims=True)
        sum_h2 = jnp.sum(h * h, axis=-1, keepdims=True)
        mean = sum_h * inv_n
        var = jnp.maximum(sum_h2 * inv_n - mean * mean, 0.0)

        h_norm = (h - mean) * jax.lax.rsqrt(var + eps)
        # gamma/beta are f32 and zero-padded, so padded lanes return to exactly 0.
        h_act = jnp.maximum(h_norm * gamma_ref[...] + beta_ref[...], 0.0)

        # lin2: [sub_m, n_hidden_p] @ [n_hidden_p, n_out_p] -> f32 (padded rows of W2^T
        # are zero, so padded hidden lanes contribute nothing).
        o_ref[rows, :] = jnp.dot(
            h_act.astype(w2_ref.dtype), w2_ref[...],
            preferred_element_type=jnp.float32,
        ).astype(o_ref.dtype)


def prepare_projection_params(w1_t, gamma, beta, w2_t, *, compute_dtype=jnp.bfloat16):
    """Pad to lane-dense widths and cast ONCE (at parameter-setup time, not per call).

    w1_t: [n_in, n_hidden] (lin1 weight, pre-transposed); gamma/beta: [n_hidden];
    w2_t: [n_hidden, n_out] (lin2 weight, pre-transposed).
    """
    n_in, n_hidden = w1_t.shape
    n_out = w2_t.shape[1]
    n_in_p = _round_up(n_in, LANE)
    n_hidden_p = _round_up(n_hidden, LANE)
    n_out_p = _round_up(n_out, LANE)
    return {
        "w1": _pad2(w1_t, n_in_p, n_hidden_p).astype(compute_dtype),
        "gamma": _pad2(jnp.reshape(gamma, (1, n_hidden)), 1, n_hidden_p).astype(jnp.float32),
        "beta": _pad2(jnp.reshape(beta, (1, n_hidden)), 1, n_hidden_p).astype(jnp.float32),
        "w2": _pad2(w2_t, n_hidden_p, n_out_p).astype(compute_dtype),
        "dims": (n_in, n_hidden, n_out),
    }


def projection_forward(x, params, *, eps=1e-5, tile_m=None, out_dtype=None):
    """x: [B, n_in]; params: output of prepare_projection_params."""
    w1_p, w2_p = params["w1"], params["w2"]
    gamma_p, beta_p = params["gamma"], params["beta"]
    n_in, n_hidden, n_out = params["dims"]
    n_in_p, n_hidden_p = w1_p.shape
    n_out_p = w2_p.shape[1]
    compute_dtype = w1_p.dtype

    B = x.shape[0]
    if out_dtype is None:
        out_dtype = x.dtype

    chip_vmem = _chip_vmem_bytes()

    # Batch tile selection:
    #   B <= 128       -> single grid step (latency-bound tiny batch)
    #   128 < B <= 256 -> tile_m=128 so grid=(2,) shards across both v7x TensorCores
    #   B > 256        -> 256 default; 512 where VMEM is generous (v5e/v6e, 128 MiB)
    if tile_m is None:
        if B <= 128:
            tile_m = _round_up(B, 8)
        elif B <= 256:
            tile_m = 128
        else:
            tile_m = 512 if chip_vmem >= (96 << 20) else 256
    B_pad = _round_up(B, tile_m)
    grid = (B_pad // tile_m,)

    # Sub-tile rows for MXU/VPU overlap inside a grid step.
    sub_m = tile_m if tile_m <= 128 else 128

    # Only x is padded/cast per call (weights were prepared once).
    x_p = _pad2(x, B_pad, n_in_p).astype(compute_dtype)

    kernel = functools.partial(projection_kernel, eps=eps, n_hidden=n_hidden, sub_m=sub_m)

    # Explicit VMEM budget: x/out tiles are double-buffered, resident weights are
    # single-buffered (pl.Buffered(1)); cap against the actual chip's VMEM capacity.
    dsz = jnp.dtype(compute_dtype).itemsize
    osz = jnp.dtype(out_dtype).itemsize
    vmem_raw = (2 * tile_m * n_in_p * dsz          # x tile (double-buffered)
                + n_in_p * n_hidden_p * dsz        # W1^T (resident, single-buffered)
                + n_hidden_p * n_out_p * dsz       # W2^T (resident, single-buffered)
                + 2 * 2 * n_hidden_p * 4           # gamma / beta
                + 2 * tile_m * n_out_p * osz       # out tile (double-buffered)
                + 6 * sub_m * n_hidden_p * 4)      # f32 intermediates headroom
    vmem_limit = int(1.25 * vmem_raw) + (2 << 20)
    vmem_cap = max(chip_vmem - (8 << 20), 16 << 20)   # ~56 MiB on v7x, ~120 MiB on v5e/v6e
    vmem_limit = min(max(vmem_limit, 16 << 20), vmem_cap)

    flops = 2 * B_pad * (n_in_p * n_hidden_p + n_hidden_p * n_out_p)
    bytes_accessed = (x_p.size * dsz + w1_p.size * dsz + w2_p.size * dsz
                      + gamma_p.size * 4 + beta_p.size * 4 + B_pad * n_out_p * osz)

    out_p = pl.pallas_call(
        kernel,
        out_shape=jax.ShapeDtypeStruct((B_pad, n_out_p), out_dtype),
        grid_spec=pltpu.PrefetchScalarGridSpec(
            num_scalar_prefetch=0,
            grid=grid,
            in_specs=[
                pl.BlockSpec((tile_m, n_in_p), lambda i: (i, 0)),            # x tile (streamed)
                _resident_spec((n_in_p, n_hidden_p), lambda i: (0, 0)),      # W1^T (resident)
                _resident_spec((1, n_hidden_p), lambda i: (0, 0)),           # LN gamma (f32)
                _resident_spec((1, n_hidden_p), lambda i: (0, 0)),           # LN beta  (f32)
                _resident_spec((n_hidden_p, n_out_p), lambda i: (0, 0)),     # W2^T (resident)
            ],
            out_specs=pl.BlockSpec((tile_m, n_out_p), lambda i: (i, 0)),
        ),
        compiler_params=pltpu.CompilerParams(
            dimension_semantics=("parallel",),
            vmem_limit_bytes=vmem_limit,
        ),
        cost_estimate=pl.CostEstimate(
            flops=int(flops),
            transcendentals=int(B_pad),            # one rsqrt per row
            bytes_accessed=int(bytes_accessed),
        ),
    )(x_p, w1_p, gamma_p, beta_p, w2_p)

    # Strip batch / lane padding.
    return out_p[:B, :n_out]


def reference_forward(x, w1_t, gamma, beta, w2_t, eps=1e-5):
    h = x @ w1_t
    mean = h.mean(axis=-1, keepdims=True)
    var = ((h - mean) ** 2).mean(axis=-1, keepdims=True)
    h = (h - mean) * jax.lax.rsqrt(var + eps) * gamma + beta
    h = jnp.maximum(h, 0.0)
    return h @ w2_t


if __name__ == "__main__":
    # Small shapes consistent with the module's forward: x is [batch, n_in].
    B, n_in, n_hidden, n_out = 16, 32, 64, 16

    key = jax.random.PRNGKey(0)
    kx, kw1, kw2 = jax.random.split(key, 3)

    x = jax.random.normal(kx, (B, n_in), dtype=jnp.float32)

    # PyTorch-style init: Linear weights ~ U(-1/sqrt(fan_in), 1/sqrt(fan_in));
    # use_bn=True => lin1/lin2 have no biases; LayerNorm gamma=1, beta=0.
    # Weights stored pre-transposed ([in, out]) for the kernel.
    bound1 = 1.0 / (n_in ** 0.5)
    w1_t = jax.random.uniform(kw1, (n_in, n_hidden), jnp.float32, -bound1, bound1)
    bound2 = 1.0 / (n_hidden ** 0.5)
    w2_t = jax.random.uniform(kw2, (n_hidden, n_out), jnp.float32, -bound2, bound2)
    gamma = jnp.ones((n_hidden,), jnp.float32)
    beta = jnp.zeros((n_hidden,), jnp.float32)

    # Pad/cast weights once (parameter setup), then run the fused kernel.
    params = prepare_projection_params(w1_t, gamma, beta, w2_t)
    out = projection_forward(x, params)
    out = jax.block_until_ready(out)

    ref = reference_forward(x, w1_t, gamma, beta, w2_t)
    assert out.shape == (B, n_out)
    assert bool(jnp.all(jnp.isfinite(out)))
    # bf16 matmul operands + one-pass variance vs. the pure-f32 reference -> loose tolerance.
    assert jnp.allclose(out, ref, atol=5e-2, rtol=5e-2), "mismatch vs reference"

    print("KERNEL_OK")
</pallas_src>

<mosaic_0001>
module attributes {stable_mosaic.version = 11 : i64} {
  func.func @projection_kernel(%arg0: i32, %arg1: memref<16x128xbf16, #tpu.memory_space<vmem>>, %arg2: memref<128x128xbf16, #tpu.memory_space<vmem>>, %arg3: memref<1x128xf32, #tpu.memory_space<vmem>>, %arg4: memref<1x128xf32, #tpu.memory_space<vmem>>, %arg5: memref<128x128xbf16, #tpu.memory_space<vmem>>, %arg6: memref<16x128xf32, #tpu.memory_space<vmem>>) attributes {dimension_semantics = [#tpu.dimension_semantics<parallel>], iteration_bounds = array<i64: 1>, scalar_prefetch = 0 : i64, scratch_operands = 0 : i64, tpu.core_type = #tpu.core_type<tc>, window_params = [{transform_indices = @transform_0, window_bounds = array<i64: 16, 128>}, {pipeline_mode = #tpu.pipeline_mode<synchronous>, transform_indices = @transform_1, window_bounds = array<i64: 128, 128>}, {pipeline_mode = #tpu.pipeline_mode<synchronous>, transform_indices = @transform_2, window_bounds = array<i64: 1, 128>}, {pipeline_mode = #tpu.pipeline_mode<synchronous>, transform_indices = @transform_3, window_bounds = array<i64: 1, 128>}, {pipeline_mode = #tpu.pipeline_mode<synchronous>, transform_indices = @transform_4, window_bounds = array<i64: 128, 128>}, {transform_indices = @transform_5, window_bounds = array<i64: 16, 128>}]} {
    %c0 = arith.constant 0 : index
    %c0_0 = arith.constant 0 : index
    %0 = vector.load %arg1[%c0, %c0_0] : memref<16x128xbf16, #tpu.memory_space<vmem>>, vector<16x128xbf16>
    %c0_1 = arith.constant 0 : index
    %c0_2 = arith.constant 0 : index
    %1 = vector.load %arg2[%c0_1, %c0_2] : memref<128x128xbf16, #tpu.memory_space<vmem>>, vector<128x128xbf16>
    %cst = arith.constant dense<0.000000e+00> : vector<16x128xf32>
    %2 = tpu.matmul %0, %1, %cst {dimension_numbers = #tpu.dot_dimension_numbers<[1], [0], [0], [1], [0, 0, 1, 1], [], []>} : vector<16x128xbf16>, vector<128x128xbf16>, vector<16x128xf32> -> vector<16x128xf32>
    %cst_3 = arith.constant dense<0.000000e+00> : vector<16xf32>
    %3 = vector.multi_reduction <add>, %2, %cst_3 [1] : vector<16x128xf32> to vector<16xf32>
    %4 = vector.shape_cast %3 : vector<16xf32> to vector<16x1xf32>
    %5 = arith.mulf %2, %2 : vector<16x128xf32>
    %cst_4 = arith.constant dense<0.000000e+00> : vector<16xf32>
    %6 = vector.multi_reduction <add>, %5, %cst_4 [1] : vector<16x128xf32> to vector<16xf32>
    %7 = vector.shape_cast %6 : vector<16xf32> to vector<16x1xf32>
    %cst_5 = arith.constant 1.562500e-02 : f32
    %8 = vector.broadcast %cst_5 : f32 to vector<16x1xf32>
    %9 = arith.mulf %4, %8 : vector<16x1xf32>
    %cst_6 = arith.constant 1.562500e-02 : f32
    %10 = vector.broadcast %cst_6 : f32 to vector<16x1xf32>
    %11 = arith.mulf %7, %10 : vector<16x1xf32>
    %12 = arith.mulf %9, %9 : vector<16x1xf32>
    %13 = arith.subf %11, %12 : vector<16x1xf32>
    %cst_7 = arith.constant 0.000000e+00 : f32
    %14 = vector.broadcast %cst_7 : f32 to vector<16x1xf32>
    %15 = arith.maximumf %13, %14 : vector<16x1xf32>
    %16 = vector.broadcast %9 : vector<16x1xf32> to vector<16x128xf32>
    %17 = arith.subf %2, %16 : vector<16x128xf32>
    %cst_8 = arith.constant 9.99999974E-6 : f32
    %18 = vector.broadcast %cst_8 : f32 to vector<16x1xf32>
    %19 = arith.addf %15, %18 : vector<16x1xf32>
    %20 = math.rsqrt %19 : vector<16x1xf32>
    %21 = vector.broadcast %20 : vector<16x1xf32> to vector<16x128xf32>
    %22 = arith.mulf %17, %21 : vector<16x128xf32>
    %c0_9 = arith.constant 0 : index
    %c0_10 = arith.constant 0 : index
    %23 = vector.load %arg3[%c0_9, %c0_10] : memref<1x128xf32, #tpu.memory_space<vmem>>, vector<1x128xf32>
    %24 = vector.broadcast %23 : vector<1x128xf32> to vector<16x128xf32>
    %25 = arith.mulf %22, %24 : vector<16x128xf32>
    %c0_11 = arith.constant 0 : index
    %c0_12 = arith.constant 0 : index
    %26 = vector.load %arg4[%c0_11, %c0_12] : memref<1x128xf32, #tpu.memory_space<vmem>>, vector<1x128xf32>
    %27 = vector.broadcast %26 : vector<1x128xf32> to vector<16x128xf32>
    %28 = arith.addf %25, %27 : vector<16x128xf32>
    %cst_13 = arith.constant 0.000000e+00 : f32
    %29 = vector.broadcast %cst_13 : f32 to vector<16x128xf32>
    %30 = arith.maximumf %28, %29 : vector<16x128xf32>
    %31 = arith.truncf %30 : vector<16x128xf32> to vector<16x128xbf16>
    %c0_14 = arith.constant 0 : index
    %c0_15 = arith.constant 0 : index
    %32 = vector.load %arg5[%c0_14, %c0_15] : memref<128x128xbf16, #tpu.memory_space<vmem>>, vector<128x128xbf16>
    %cst_16 = arith.constant dense<0.000000e+00> : vector<16x128xf32>
    %33 = tpu.matmul %31, %32, %cst_16 {dimension_numbers = #tpu.dot_dimension_numbers<[1], [0], [0], [1], [0, 0, 1, 1], [], []>} : vector<16x128xbf16>, vector<128x128xbf16>, vector<16x128xf32> -> vector<16x128xf32>
    %c0_17 = arith.constant 0 : index
    %c0_18 = arith.constant 0 : index
    %34 = vector.load %arg6[%c0_17, %c0_18] : memref<16x128xf32, #tpu.memory_space<vmem>>, vector<16x128xf32>
    tpu.vector_store %arg6[%c0_17, %c0_18], %33 {strides = array<i32>} : memref<16x128xf32, #tpu.memory_space<vmem>>, vector<16x128xf32>,
    return
  }
  func.func @transform_0(%arg0: i32) -> (i32, i32) {
    %c0_i32 = arith.constant 0 : i32
    %c0_i32_0 = arith.constant 0 : i32
    return %arg0, %c0_i32 : i32, i32
  }
  func.func @transform_1(%arg0: i32) -> (i32, i32) {
    %c0_i32 = arith.constant 0 : i32
    %c0_i32_0 = arith.constant 0 : i32
    %c0_i32_1 = arith.constant 0 : i32
    return %c0_i32, %c0_i32_0 : i32, i32
  }
  func.func @transform_2(%arg0: i32) -> (i32, i32) {
    %c0_i32 = arith.constant 0 : i32
    %c0_i32_0 = arith.constant 0 : i32
    %c0_i32_1 = arith.constant 0 : i32
    return %c0_i32, %c0_i32_0 : i32, i32
  }
  func.func @transform_3(%arg0: i32) -> (i32, i32) {
    %c0_i32 = arith.constant 0 : i32
    %c0_i32_0 = arith.constant 0 : i32
    %c0_i32_1 = arith.constant 0 : i32
    return %c0_i32, %c0_i32_0 : i32, i32
  }
  func.func @transform_4(%arg0: i32) -> (i32, i32) {
    %c0_i32 = arith.constant 0 : i32
    %c0_i32_0 = arith.constant 0 : i32
    %c0_i32_1 = arith.constant 0 : i32
    return %c0_i32, %c0_i32_0 : i32, i32
  }
  func.func @transform_5(%arg0: i32) -> (i32, i32) {
    %c0_i32 = arith.constant 0 : i32
    %c0_i32_0 = arith.constant 0 : i32
    return %arg0, %c0_i32 : i32, i32
  }
}

</mosaic_0001>

<llo_original>
// kernel: tpu_custom_call.1
$region0: #{tpu_custom_call.1}
  #allocation0 [shape = 'u32[]', space=smem, size = 0x4, offset = 0x4, fixed_abs, tag = 'smem constant byte address 0x4 - core index']
  #allocation1 [shape = 'u32[144,128]{1,0:T(1,128)}', space=vmem, size = 0x12000, scoped, tag = 'internal scratch']
  %s0 = inlined_call_operand.hbm [shape: bf16[16,128], index: 0, kind: input, shape index: {}]
  %s1 = inlined_call_operand.hbm [shape: bf16[128,128], index: 1, kind: input, shape index: {}]
  %s2 = inlined_call_operand.vmem [shape: f32[1,128], index: 2, kind: input, shape index: {}]
  %s3 = inlined_call_operand.vmem [shape: f32[1,128], index: 3, kind: input, shape index: {}]
  %s4 = inlined_call_operand.hbm [shape: bf16[128,128], index: 4, kind: input, shape index: {}]
  %s5 = inlined_call_operand.hbm [shape: f32[16,128], index: 5, kind: output, shape index: {}]
  %s6 = sld [smem:[#allocation0]]
  $region42: #{tpu_custom_call.1} parent=0
    _
  %s8 = ssub.s32 1, %s6
  %s9 = scalar_select 0, %s8, %s6
  $region1: #{tpu_custom_call.1} parent=0
    #allocation2 [shape = 'u8[4096]{0}', space=vmem, size = 0x1000, scoped, tag = 'input window, operand 0, single buffered']
    #allocation3 [shape = 's32[1]{0}', space=sflag, size = 0x4, scoped, tag = 'scoped memory for tpu_custom_call.1']
    #allocation4 [shape = 's32[1]{0}', space=sflag, size = 0x4, scoped, tag = 'scoped memory for tpu_custom_call.1']
    #allocation5 [shape = 'u8[32768]{0}', space=vmem, size = 0x8000, scoped, tag = 'input window, operand 1, single buffered']
    #allocation6 [shape = 's32[1]{0}', space=sflag, size = 0x4, scoped, tag = 'scoped memory for tpu_custom_call.1']
    #allocation7 [shape = 'u8[32768]{0}', space=vmem, size = 0x8000, scoped, tag = 'input window, operand 4, single buffered']
    #allocation8 [shape = 'u8[8192]{0}', space=vmem, size = 0x2000, scoped, tag = 'output window, operand 0, single buffered']
    %10 = vsyncpa [#allocation3], 0
    %11 = vsyncpa [#allocation6], 0
    %12 = vsyncpa [#allocation4], 0
    // Predicated region
    $region2: #{tpu_custom_call.1} parent=1 // pred_check
      _
    $region3: #{tpu_custom_call.1} parent=1 // pred_check_branch
      %14 = sbr.rel (0) target = $region5
    $region4: #{tpu_custom_call.1} parent=1 // pred_region
      %s16 = ssub.s32 128, 128
      %17 = vsyncadd [#allocation3], %s16
      %s18 = sshll.u32 [#allocation2], 4
      %s19 = int_to_ptr.vmem [resolvable:$true] %s18
      %24 = dma.hbm_to_vmem [thread:$0]  %s0, 128, %s19, [#allocation3], 64, 64, 4
    $region5: #{tpu_custom_call.1} parent=1 // pred_fallthru
      _
    // Predicated region
    $region6: #{tpu_custom_call.1} parent=1 // pred_check
      _
    $region7: #{tpu_custom_call.1} parent=1 // pred_check_branch
      %26 = sbr.rel (0) target = $region9
    $region8: #{tpu_custom_call.1} parent=1 // pred_region
      %s28 = ssub.s32 1024, 1024
      %29 = vsyncadd [#allocation6], %s28
      %s30 = sshll.u32 [#allocation5], 4
      %s31 = int_to_ptr.vmem [resolvable:$true] %s30
      %36 = dma.hbm_to_vmem [thread:$0]  %s1, 1024, %s31, [#allocation6], 64, 64, 4
    $region9: #{tpu_custom_call.1} parent=1 // pred_fallthru
      _
    // Predicated region
    $region10: #{tpu_custom_call.1} parent=1 // pred_check
      _
    $region11: #{tpu_custom_call.1} parent=1 // pred_check_branch
      %38 = sbr.rel (0) target = $region13
    $region12: #{tpu_custom_call.1} parent=1 // pred_region
      _
    $region13: #{tpu_custom_call.1} parent=1 // pred_fallthru
      _
    // Predicated region
    $region14: #{tpu_custom_call.1} parent=1 // pred_check
      _
    $region15: #{tpu_custom_call.1} parent=1 // pred_check_branch
      %40 = sbr.rel (0) target = $region17
    $region16: #{tpu_custom_call.1} parent=1 // pred_region
      _
    $region17: #{tpu_custom_call.1} parent=1 // pred_fallthru
      _
    // Predicated region
    $region18: #{tpu_custom_call.1} parent=1 // pred_check
      _
    $region19: #{tpu_custom_call.1} parent=1 // pred_check_branch
      %42 = sbr.rel (0) target = $region21
    $region20: #{tpu_custom_call.1} parent=1 // pred_region
      %s44 = ssub.s32 1024, 1024
      %45 = vsyncadd [#allocation6], %s44
      %s46 = sshll.u32 [#allocation7], 4
      %s47 = int_to_ptr.vmem [resolvable:$true] %s46
      %52 = dma.hbm_to_vmem [thread:$0]  %s4, 1024, %s47, [#allocation6], 64, 64, 4
    $region21: #{tpu_custom_call.1} parent=1 // pred_fallthru
      _
    // Predicated region
    $region22: #{tpu_custom_call.1} parent=1 // pred_check
      _
    $region23: #{tpu_custom_call.1} parent=1 // pred_check_branch
      %54 = sbr.rel (0) target = $region25
    $region24: #{tpu_custom_call.1} parent=1 // pred_region
      %55 = dma.done [#allocation3], 128
    $region25: #{tpu_custom_call.1} parent=1 // pred_fallthru
      _
    // Predicated region
    $region26: #{tpu_custom_call.1} parent=1 // pred_check
      _
    $region27: #{tpu_custom_call.1} parent=1 // pred_check_branch
      %57 = sbr.rel (0) target = $region29
    $region28: #{tpu_custom_call.1} parent=1 // pred_region
      %58 = dma.done [#allocation6], 1024
    $region29: #{tpu_custom_call.1} parent=1 // pred_fallthru
      _
    // Predicated region
    $region30: #{tpu_custom_call.1} parent=1 // pred_check
      _
    $region31: #{tpu_custom_call.1} parent=1 // pred_check_branch
      %60 = sbr.rel (0) target = $region33
    $region32: #{tpu_custom_call.1} parent=1 // pred_region
      %61 = dma.done [#allocation6], 1024
    $region33: #{tpu_custom_call.1} parent=1 // pred_fallthru
      _
    %v63 = vld [vmem:[#allocation2] sm:$0xf]
    %v64 = vld [vmem:[#allocation2 + $0x4] sm:$0xf]
    %v65 = vld [vmem:[#allocation5] sm:$0xf]
    %v66 = vld [vmem:[#allocation5 + $0x4] sm:$0xf]
    %v67 = vld [vmem:[#allocation5 + $0x8] sm:$0xf]
    %v68 = vld [vmem:[#allocation5 + $0xc] sm:$0xf]
    %v69 = vld [vmem:[#allocation5 + $0x10] sm:$0xf]
    %v70 = vld [vmem:[#allocation5 + $0x14] sm:$0xf]
    %v71 = vld [vmem:[#allocation5 + $0x18] sm:$0xf]
    %v72 = vld [vmem:[#allocation5 + $0x1c] sm:$0xf]
    %v73 = vld [vmem:[#allocation5 + $0x20] sm:$0xf]
    %v74 = vld [vmem:[#allocation5 + $0x24] sm:$0xf]
    %v75 = vld [vmem:[#allocation5 + $0x28] sm:$0xf]
    %v76 = vld [vmem:[#allocation5 + $0x2c] sm:$0xf]
    %v77 = vld [vmem:[#allocation5 + $0x30] sm:$0xf]
    %v78 = vld [vmem:[#allocation5 + $0x34] sm:$0xf]
    %v79 = vld [vmem:[#allocation5 + $0x38] sm:$0xf]
    %v80 = vld [vmem:[#allocation5 + $0x3c] sm:$0xf]
    %v83 = vunpack.c.l.b16 %v63
    %v84 = vunpack.c.l.b16 %v64
    %v85 = vpack.c.b16 %v84, %v83
    %v103 = vunpack.c.l.b16 %v65
    %v104 = vunpack.c.l.b16 %v66
    %v105 = vunpack.c.l.b16 %v67
    %v106 = vunpack.c.l.b16 %v68
    %v107 = vunpack.c.l.b16 %v69
    %v108 = vunpack.c.l.b16 %v70
    %v109 = vunpack.c.l.b16 %v71
    %v110 = vunpack.c.l.b16 %v72
    %v111 = vunpack.c.l.b16 %v73
    %v112 = vunpack.c.l.b16 %v74
    %v113 = vunpack.c.l.b16 %v75
    %v114 = vunpack.c.l.b16 %v76
    %v115 = vunpack.c.l.b16 %v77
    %v116 = vunpack.c.l.b16 %v78
    %v117 = vunpack.c.l.b16 %v79
    %v118 = vunpack.c.l.b16 %v80
    %v119 = vpack.c.b16 %v104, %v103
    %v120 = vpack.c.b16 %v106, %v105
    %v121 = vpack.c.b16 %v108, %v107
    %v122 = vpack.c.b16 %v110, %v109
    %v123 = vpack.c.b16 %v112, %v111
    %v124 = vpack.c.b16 %v114, %v113
    %v125 = vpack.c.b16 %v116, %v115
    %v126 = vpack.c.b16 %v118, %v117
    %135 = vmatprep.subr.bf16.mxu0 0
    %136 = vmatpush1.bf16.msra.mxu0 %v119
    %137 = vmatprep.subr.bf16.mxu0 0
    %138 = vmatpush1.bf16.msra.mxu0 %v120
    %139 = vmatprep.subr.bf16.mxu0 0
    %140 = vmatpush1.bf16.msra.mxu0 %v121
    %141 = vmatprep.subr.bf16.mxu0 0
    %142 = vmatpush1.bf16.msra.mxu0 %v122
    %143 = vmatprep.subr.bf16.mxu0 0
    %144 = vmatpush1.bf16.msra.mxu0 %v123
    %145 = vmatprep.subr.bf16.mxu0 0
    %146 = vmatpush1.bf16.msra.mxu0 %v124
    %147 = vmatprep.subr.bf16.mxu0 0
    %148 = vmatpush1.bf16.msra.mxu0 %v125
    %149 = vmatprep.subr.bf16.mxu0 0
    %150 = vmatpush1.bf16.msra.mxu0 %v126
    %151 = vmatprep.subr.bf16.mxu0 0
    %152 = vmatpush1.bf16.msra.mxu0 0
    %153 = vmatprep.subr.bf16.mxu0 0
    %154 = vmatpush1.bf16.msra.mxu0 0
    %155 = vmatprep.subr.bf16.mxu0 0
    %156 = vmatpush1.bf16.msra.mxu0 0
    %157 = vmatprep.subr.bf16.mxu0 0
    %158 = vmatpush1.bf16.msra.mxu0 0
    %159 = vmatprep.subr.bf16.mxu0 0
    %160 = vmatpush1.bf16.msra.mxu0 0
    %161 = vmatprep.subr.bf16.mxu0 0
    %162 = vmatpush1.bf16.msra.mxu0 0
    %163 = vmatprep.subr.bf16.mxu0 0
    %164 = vmatpush1.bf16.msra.mxu0 0
    %165 = vmatprep.subr.bf16.mxu0 0
    %166 = vmatpush1.bf16.msra.mxu0 0
    %167 = vmatprep.mubr.bf16.mxu0 0
    %168 = vmatmul.mubr.bf16.gmra.mrb[0].mxu0 %v85
    %v169 = vpop.f32.mrb[0].mxu0
    %v170 = vadd.f32 0.0, %v169
    %v171 = vpop.f32.mrb[0].mxu0
    %v172 = vpop.f32.mrb[0].mxu0
    %v173 = vadd.f32 0.0, %v172
    %v174 = vpop.f32.mrb[0].mxu0
    %175 = vdwg.mxu0
    %176 = vadd.xlane.f32.xlu0 %v170
    %v177 = vpop.xlane.xlu0 %176
    %178 = vadd.xlane.f32.xlu0 %v173
    %v179 = vpop.xlane.xlu0 %178
    %v180 = vmul.f32 %v170, %v170
    %v181 = vmul.f32 %v173, %v173
    %182 = vadd.xlane.f32.xlu0 %v180
    %v183 = vpop.xlane.xlu0 %182
    %184 = vadd.xlane.f32.xlu0 %v181
    %v185 = vpop.xlane.xlu0 %184
    %v186 = vmul.f32 %v177, 0.015625
    %v187 = vmul.f32 %v179, 0.015625
    %v188 = vmul.f32 %v183, 0.015625
    %v189 = vmul.f32 %v185, 0.015625
    %v190 = vmul.f32 %v186, %v186
    %v191 = vmul.f32 %v187, %v187
    %v192 = vsub.f32 %v188, %v190
    %v193 = vsub.f32 %v189, %v191
    %v194 = vmax.f32 %v192, 0.0
    %v195 = vmax.f32 %v193, 0.0
    %v196 = vsub.f32 %v170, %v186
    %v197 = vsub.f32 %v173, %v187
    %v198 = vadd.f32 %v194, 1e-05
    %v199 = vadd.f32 %v195, 1e-05
    %v200 = vrsqrt.pop %v198
    %v201 = vrsqrt.pop %v199
    %v202 = vmul.f32 %v196, %v200
    %v203 = vmul.f32 %v197, %v201
    %v204 = vld [vmem:[%s2] sm:$0x1]
    %v206 = vlaneseq
    %v207 = vshrl.u32 %v206, 7
    %v208 = vsub.s32 0, %v207
    %v209 = vrot.slane %v204, %v208
    %v211 = vmul.f32 %v202, %v209
    %v212 = vmul.f32 %v203, %v209
    %v213 = vld [vmem:[%s3] sm:$0x1]
    %v215 = vlaneseq
    %v216 = vshrl.u32 %v215, 7
    %v217 = vsub.s32 0, %v216
    %v218 = vrot.slane %v213, %v217
    %v220 = vadd.f32 %v211, %v218
    %v221 = vadd.f32 %v212, %v218
    %v222 = vmax.f32 %v220, 0.0
    %v223 = vmax.f32 %v221, 0.0
    %v224 = vpack.c.bf16 %v223, %v222
    %v225 = vld [vmem:[#allocation7] sm:$0xf]
    %v226 = vld [vmem:[#allocation7 + $0x4] sm:$0xf]
    %v227 = vld [vmem:[#allocation7 + $0x8] sm:$0xf]
    %v228 = vld [vmem:[#allocation7 + $0xc] sm:$0xf]
    %v229 = vld [vmem:[#allocation7 + $0x10] sm:$0xf]
    %v230 = vld [vmem:[#allocation7 + $0x14] sm:$0xf]
    %v231 = vld [vmem:[#allocation7 + $0x18] sm:$0xf]
    %v232 = vld [vmem:[#allocation7 + $0x1c] sm:$0xf]
    %v233 = vld [vmem:[#allocation7 + $0x20] sm:$0xf]
    %v234 = vld [vmem:[#allocation7 + $0x24] sm:$0xf]
    %v235 = vld [vmem:[#allocation7 + $0x28] sm:$0xf]
    %v236 = vld [vmem:[#allocation7 + $0x2c] sm:$0xf]
    %v237 = vld [vmem:[#allocation7 + $0x30] sm:$0xf]
    %v238 = vld [vmem:[#allocation7 + $0x34] sm:$0xf]
    %v239 = vld [vmem:[#allocation7 + $0x38] sm:$0xf]
    %v240 = vld [vmem:[#allocation7 + $0x3c] sm:$0xf]
    %v257 = vunpack.c.l.b16 %v225
    %v258 = vunpack.c.l.b16 %v226
    %v259 = vunpack.c.l.b16 %v227
    %v260 = vunpack.c.l.b16 %v228
    %v261 = vunpack.c.l.b16 %v229
    %v262 = vunpack.c.l.b16 %v230
    %v263 = vunpack.c.l.b16 %v231
    %v264 = vunpack.c.l.b16 %v232
    %v265 = vunpack.c.l.b16 %v233
    %v266 = vunpack.c.l.b16 %v234
    %v267 = vunpack.c.l.b16 %v235
    %v268 = vunpack.c.l.b16 %v236
    %v269 = vunpack.c.l.b16 %v237
    %v270 = vunpack.c.l.b16 %v238
    %v271 = vunpack.c.l.b16 %v239
    %v272 = vunpack.c.l.b16 %v240
    %v273 = vpack.c.b16 %v258, %v257
    %v274 = vpack.c.b16 %v260, %v259
    %v275 = vpack.c.b16 %v262, %v261
    %v276 = vpack.c.b16 %v264, %v263
    %v277 = vpack.c.b16 %v266, %v265
    %v278 = vpack.c.b16 %v268, %v267
    %v279 = vpack.c.b16 %v270, %v269
    %v280 = vpack.c.b16 %v272, %v271
    %289 = vmatprep.subr.bf16.mxu0 0
    %290 = vmatpush1.bf16.msra.mxu0 %v273
    %291 = vmatprep.subr.bf16.mxu0 0
    %292 = vmatpush1.bf16.msra.mxu0 %v274
    %293 = vmatprep.subr.bf16.mxu0 0
    %294 = vmatpush1.bf16.msra.mxu0 %v275
    %295 = vmatprep.subr.bf16.mxu0 0
    %296 = vmatpush1.bf16.msra.mxu0 %v276
    %297 = vmatprep.subr.bf16.mxu0 0
    %298 = vmatpush1.bf16.msra.mxu0 %v277
    %299 = vmatprep.subr.bf16.mxu0 0
    %300 = vmatpush1.bf16.msra.mxu0 %v278
    %301 = vmatprep.subr.bf16.mxu0 0
    %302 = vmatpush1.bf16.msra.mxu0 %v279
    %303 = vmatprep.subr.bf16.mxu0 0
    %304 = vmatpush1.bf16.msra.mxu0 %v280
    %305 = vmatprep.subr.bf16.mxu0 0
    %306 = vmatpush1.bf16.msra.mxu0 0
    %307 = vmatprep.subr.bf16.mxu0 0
    %308 = vmatpush1.bf16.msra.mxu0 0
    %309 = vmatprep.subr.bf16.mxu0 0
    %310 = vmatpush1.bf16.msra.mxu0 0
    %311 = vmatprep.subr.bf16.mxu0 0
    %312 = vmatpush1.bf16.msra.mxu0 0
    %313 = vmatprep.subr.bf16.mxu0 0
    %314 = vmatpush1.bf16.msra.mxu0 0
    %315 = vmatprep.subr.bf16.mxu0 0
    %316 = vmatpush1.bf16.msra.mxu0 0
    %317 = vmatprep.subr.bf16.mxu0 0
    %318 = vmatpush1.bf16.msra.mxu0 0
    %319 = vmatprep.subr.bf16.mxu0 0
    %320 = vmatpush1.bf16.msra.mxu0 0
    %321 = vmatprep.mubr.bf16.mxu0 0
    %322 = vmatmul.mubr.bf16.gmra.mrb[0].mxu0 %v224
    %v323 = vpop.f32.mrb[0].mxu0
    %v324 = vadd.f32 0.0, %v323
    %v325 = vpop.f32.mrb[0].mxu0
    %v326 = vpop.f32.mrb[0].mxu0
    %v327 = vadd.f32 0.0, %v326
    %v328 = vpop.f32.mrb[0].mxu0
    %329 = vdwg.mxu0
    %330 = vst [vmem:[#allocation8] sm:$0xff] %v324
    %331 = vst [vmem:[#allocation8 + $0x8] sm:$0xff] %v327
    // Predicated region
    $region34: #{tpu_custom_call.1} parent=1 // pred_check
      _
    $region35: #{tpu_custom_call.1} parent=1 // pred_check_branch
      %333 = sbr.rel (0) target = $region37
    $region36: #{tpu_custom_call.1} parent=1 // pred_region
      %s335 = ssub.s32 256, 256
      %336 = vsyncadd [#allocation4], %s335
      %s337 = sshll.u32 [#allocation8], 4
      %s338 = int_to_ptr.vmem [resolvable:$true] %s337
      %343 = dma.vmem_to_hbm [thread:$0]  %s338, 256, %s5, [#allocation4], 128, 128, 8
    $region37: #{tpu_custom_call.1} parent=1 // pred_fallthru
      _
    // Predicated region
    $region38: #{tpu_custom_call.1} parent=1 // pred_check
      _
    $region39: #{tpu_custom_call.1} parent=1 // pred_check_branch
      %345 = sbr.rel (0) target = $region41
    $region40: #{tpu_custom_call.1} parent=1 // pred_region
      %346 = dma.done [#allocation4], 256
    $region41: #{tpu_custom_call.1} parent=1 // pred_fallthru
      _
    %347 = vsyncpa [#allocation3], 1
    %348 = vsyncpa [#allocation6], 1
    %349 = vsyncpa [#allocation4], 1

</llo_original>
